<compile_context>
chip_gen: v7x
topology: tpu7x:2x2x1
jax: 0.10.0
libtpu: 0.0.40
codegen_flags: <defaults>
</compile_context>

<pallas_src>
import functools

import numpy as np
import jax
import jax.numpy as jnp
from jax.experimental import pallas as pl
from jax.experimental.pallas import tpu as pltpu


def _make_offsets(span, repeat, seed=0):
    """Deterministic replica of the module's np.random offset sampling."""
    rng = np.random.RandomState(seed)
    offs = []
    for _ in range(repeat):
        h_flag = rng.uniform()
        h_offset = int(rng.randint(1, span + 1))
        if h_flag > 0.5:
            h_offset = -h_offset
        w_flag = rng.uniform()
        w_offset = int(rng.randint(1, span + 1))
        if w_flag > 0.5:
            w_offset = -w_offset
        offs.append((h_offset, w_offset))
    return tuple(offs)


def _rd_loss_kernel(pred_ref, gt_ref, out_ref, *, span, H, W, offsets):
    """One (Bt, H, W) slab of images per grid step.

    pred_ref/gt_ref: (Bt, H, W) VMEM tiles (input dtype, upcast here).
    out_ref: (1, 1, 1) sum of |pred_rd_hat - gt_rd_hat| over this slab.
    """
    p = pred_ref[...].astype(jnp.float32)           # (Bt, H, W)
    g = gt_ref[...].astype(jnp.float32)
    base_p = p[:, span:H - span, span:W - span]     # (Bt, Hb, Wb)
    base_g = g[:, span:H - span, span:W - span]

    # NOTE: shifted slices are static but not (8,128)-aligned; if the bundle
    # dump shows relayout copies, switch to pltpu.roll on the full frame.
    def p_diff(ho, wo):
        return base_p - p[:, span + ho:H - span + ho, span + wo:W - span + wo]

    def g_diff(ho, wo):
        return base_g - g[:, span + ho:H - span + ho, span + wo:W - span + wo]

    # ---- Pass 1: squared L2 norm over the repeat axis (init from offset 0). --
    ho0, wo0 = offsets[0]
    pd = p_diff(ho0, wo0)
    gd = g_diff(ho0, wo0)
    p_ss = pd * pd
    g_ss = gd * gd
    for (ho, wo) in offsets[1:]:
        pd = p_diff(ho, wo)
        gd = g_diff(ho, wo)
        p_ss = p_ss + pd * pd
        g_ss = g_ss + gd * gd

    # masked_fill(norm == 0, 1.0) then divide  ==  masked rsqrt on the sum of
    # squares (ss == 0 exactly when norm == 0).  rsqrt runs on the EUP slot.
    one = jnp.float32(1.0)
    p_inv = jnp.where(p_ss == 0.0, one, jax.lax.rsqrt(p_ss))
    g_inv = jnp.where(g_ss == 0.0, one, jax.lax.rsqrt(g_ss))

    # ---- Pass 2: recompute diffs, accumulate L1 into one (Bt, Hb, Wb) map. --
    pd = p_diff(ho0, wo0)
    gd = g_diff(ho0, wo0)
    acc = jnp.abs(pd * p_inv - gd * g_inv)
    for (ho, wo) in offsets[1:]:
        pd = p_diff(ho, wo)
        gd = g_diff(ho, wo)
        acc = acc + jnp.abs(pd * p_inv - gd * g_inv)

    # Single cross-lane reduction per grid step.
    out_ref[...] = jnp.sum(acc).reshape(1, 1, 1)


def rd_loss9(pred, gt, *, span, offsets, block_b=None):
    """pred, gt: [B, 1, H, W] (NCHW, C == 1). Returns scalar loss (float32)."""
    B, C, H, W = pred.shape
    assert C == 1, "RD_loss9 expects single-channel depth maps"
    Hb = H - 2 * span
    Wb = W - 2 * span
    R = len(offsets)
    assert Hb > 0 and Wb > 0 and R > 0

    # Keep the original dtype; the kernel upcasts in VMEM (no extra HBM copy).
    pred2 = pred.reshape(B, H, W)
    gt2 = gt.reshape(B, H, W)
    elt_bytes = jnp.dtype(pred2.dtype).itemsize

    # Choose batch tile: 2 inputs x 2 pipeline buffers x Bt*H*W*elt must stay
    # within a few MiB of VMEM (conservative so the same sizing fits v7x too).
    if block_b is None:
        budget = 4 * 1024 * 1024
        bytes_per_img = H * W * elt_bytes
        block_b = max(1, budget // (4 * bytes_per_img))
    block_b = max(1, min(int(block_b), B))
    # Keep at least 2 grid steps when B >= 2 (v7x has 2 TensorCores).
    if B >= 2:
        block_b = min(block_b, pl.cdiv(B, 2))

    num_blocks = pl.cdiv(B, block_b)
    Bpad = num_blocks * block_b
    if Bpad != B:
        # Zero padding contributes exactly 0 to the L1 sum (diff=0, inv=1).
        pad_p = jnp.zeros((Bpad - B, H, W), pred2.dtype)
        pad_g = jnp.zeros((Bpad - B, H, W), gt2.dtype)
        pred2 = jnp.concatenate([pred2, pad_p], axis=0)
        gt2 = jnp.concatenate([gt2, pad_g], axis=0)

    # TODO(synk): for large H/W, additionally tile rows with a 2*span halo
    # (overlapping pl.Element-offset blocks) instead of whole-image blocks.
    kernel = functools.partial(
        _rd_loss_kernel, span=span, H=H, W=W, offsets=tuple(offsets))

    per_block_sums = pl.pallas_call(
        kernel,
        out_shape=jax.ShapeDtypeStruct((num_blocks, 1, 1), jnp.float32),
        grid_spec=pltpu.PrefetchScalarGridSpec(
            num_scalar_prefetch=0,
            grid=(num_blocks,),
            in_specs=[
                pl.BlockSpec((block_b, H, W), lambda b: (b, 0, 0)),
                pl.BlockSpec((block_b, H, W), lambda b: (b, 0, 0)),
            ],
            out_specs=pl.BlockSpec((1, 1, 1), lambda b: (b, 0, 0)),
        ),
        compiler_params=pltpu.CompilerParams(
            dimension_semantics=("parallel",)),
    )(pred2, gt2)

    # L1Loss(reduction='mean') over the (B, Hb, Wb, R) stacked/permuted tensor.
    return jnp.sum(per_block_sums) / jnp.float32(B * Hb * Wb * R)


if __name__ == "__main__":
    # Small shapes consistent with the module's forward (B, 1, H, W).
    B, C, H, W = 2, 1, 16, 16
    span = 2
    repeat = 8

    key = jax.random.PRNGKey(0)
    kp, kg = jax.random.split(key)
    pred = jax.random.uniform(kp, (B, C, H, W), dtype=jnp.float32)
    gt = jax.random.uniform(kg, (B, C, H, W), dtype=jnp.float32)

    # TODO(synk): the reference draws fresh np.random offsets on every forward
    # call; here they are drawn deterministically once on the host and baked
    # into the kernel as static slice offsets.
    offsets = _make_offsets(span, repeat, seed=0)

    loss = rd_loss9(pred, gt, span=span, offsets=offsets)
    loss = jax.block_until_ready(loss)
    assert loss.shape == () and jnp.isfinite(loss)
    print("KERNEL_OK")
</pallas_src>

<mosaic_0001>
module attributes {stable_mosaic.version = 11 : i64} {
  func.func @_rd_loss_kernel(%arg0: i32, %arg1: memref<1x16x16xf32, #tpu.memory_space<vmem>>, %arg2: memref<1x16x16xf32, #tpu.memory_space<vmem>>, %arg3: memref<1x1x1xf32, #tpu.memory_space<vmem>>) attributes {dimension_semantics = [#tpu.dimension_semantics<parallel>], iteration_bounds = array<i64: 2>, scalar_prefetch = 0 : i64, scratch_operands = 0 : i64, tpu.core_type = #tpu.core_type<tc>, window_params = [{transform_indices = @transform_0, window_bounds = array<i64: 1, 16, 16>}, {transform_indices = @transform_1, window_bounds = array<i64: 1, 16, 16>}, {transform_indices = @transform_2, window_bounds = array<i64: 1, 1, 1>}]} {
    %c0 = arith.constant 0 : index
    %c0_0 = arith.constant 0 : index
    %c0_1 = arith.constant 0 : index
    %0 = vector.load %arg1[%c0, %c0_0, %c0_1] : memref<1x16x16xf32, #tpu.memory_space<vmem>>, vector<1x16x16xf32>
    %c0_2 = arith.constant 0 : index
    %c0_3 = arith.constant 0 : index
    %c0_4 = arith.constant 0 : index
    %1 = vector.load %arg2[%c0_2, %c0_3, %c0_4] : memref<1x16x16xf32, #tpu.memory_space<vmem>>, vector<1x16x16xf32>
    %2 = vector.extract_strided_slice %0 {offsets = [0, 2, 2], sizes = [1, 12, 12], strides = [1, 1, 1]} : vector<1x16x16xf32> to vector<1x12x12xf32>
    %3 = vector.extract_strided_slice %1 {offsets = [0, 2, 2], sizes = [1, 12, 12], strides = [1, 1, 1]} : vector<1x16x16xf32> to vector<1x12x12xf32>
    %4 = vector.extract_strided_slice %0 {offsets = [0, 0, 0], sizes = [1, 12, 12], strides = [1, 1, 1]} : vector<1x16x16xf32> to vector<1x12x12xf32>
    %5 = arith.subf %2, %4 : vector<1x12x12xf32>
    %6 = vector.extract_strided_slice %1 {offsets = [0, 0, 0], sizes = [1, 12, 12], strides = [1, 1, 1]} : vector<1x16x16xf32> to vector<1x12x12xf32>
    %7 = arith.subf %3, %6 : vector<1x12x12xf32>
    %8 = arith.mulf %5, %5 : vector<1x12x12xf32>
    %9 = arith.mulf %7, %7 : vector<1x12x12xf32>
    %10 = vector.extract_strided_slice %0 {offsets = [0, 0, 1], sizes = [1, 12, 12], strides = [1, 1, 1]} : vector<1x16x16xf32> to vector<1x12x12xf32>
    %11 = arith.subf %2, %10 : vector<1x12x12xf32>
    %12 = vector.extract_strided_slice %1 {offsets = [0, 0, 1], sizes = [1, 12, 12], strides = [1, 1, 1]} : vector<1x16x16xf32> to vector<1x12x12xf32>
    %13 = arith.subf %3, %12 : vector<1x12x12xf32>
    %14 = arith.mulf %11, %11 : vector<1x12x12xf32>
    %15 = arith.addf %8, %14 : vector<1x12x12xf32>
    %16 = arith.mulf %13, %13 : vector<1x12x12xf32>
    %17 = arith.addf %9, %16 : vector<1x12x12xf32>
    %18 = vector.extract_strided_slice %0 {offsets = [0, 3, 3], sizes = [1, 12, 12], strides = [1, 1, 1]} : vector<1x16x16xf32> to vector<1x12x12xf32>
    %19 = arith.subf %2, %18 : vector<1x12x12xf32>
    %20 = vector.extract_strided_slice %1 {offsets = [0, 3, 3], sizes = [1, 12, 12], strides = [1, 1, 1]} : vector<1x16x16xf32> to vector<1x12x12xf32>
    %21 = arith.subf %3, %20 : vector<1x12x12xf32>
    %22 = arith.mulf %19, %19 : vector<1x12x12xf32>
    %23 = arith.addf %15, %22 : vector<1x12x12xf32>
    %24 = arith.mulf %21, %21 : vector<1x12x12xf32>
    %25 = arith.addf %17, %24 : vector<1x12x12xf32>
    %26 = vector.extract_strided_slice %0 {offsets = [0, 3, 1], sizes = [1, 12, 12], strides = [1, 1, 1]} : vector<1x16x16xf32> to vector<1x12x12xf32>
    %27 = arith.subf %2, %26 : vector<1x12x12xf32>
    %28 = vector.extract_strided_slice %1 {offsets = [0, 3, 1], sizes = [1, 12, 12], strides = [1, 1, 1]} : vector<1x16x16xf32> to vector<1x12x12xf32>
    %29 = arith.subf %3, %28 : vector<1x12x12xf32>
    %30 = arith.mulf %27, %27 : vector<1x12x12xf32>
    %31 = arith.addf %23, %30 : vector<1x12x12xf32>
    %32 = arith.mulf %29, %29 : vector<1x12x12xf32>
    %33 = arith.addf %25, %32 : vector<1x12x12xf32>
    %34 = vector.extract_strided_slice %0 {offsets = [0, 0, 1], sizes = [1, 12, 12], strides = [1, 1, 1]} : vector<1x16x16xf32> to vector<1x12x12xf32>
    %35 = arith.subf %2, %34 : vector<1x12x12xf32>
    %36 = vector.extract_strided_slice %1 {offsets = [0, 0, 1], sizes = [1, 12, 12], strides = [1, 1, 1]} : vector<1x16x16xf32> to vector<1x12x12xf32>
    %37 = arith.subf %3, %36 : vector<1x12x12xf32>
    %38 = arith.mulf %35, %35 : vector<1x12x12xf32>
    %39 = arith.addf %31, %38 : vector<1x12x12xf32>
    %40 = arith.mulf %37, %37 : vector<1x12x12xf32>
    %41 = arith.addf %33, %40 : vector<1x12x12xf32>
    %42 = vector.extract_strided_slice %0 {offsets = [0, 4, 4], sizes = [1, 12, 12], strides = [1, 1, 1]} : vector<1x16x16xf32> to vector<1x12x12xf32>
    %43 = arith.subf %2, %42 : vector<1x12x12xf32>
    %44 = vector.extract_strided_slice %1 {offsets = [0, 4, 4], sizes = [1, 12, 12], strides = [1, 1, 1]} : vector<1x16x16xf32> to vector<1x12x12xf32>
    %45 = arith.subf %3, %44 : vector<1x12x12xf32>
    %46 = arith.mulf %43, %43 : vector<1x12x12xf32>
    %47 = arith.addf %39, %46 : vector<1x12x12xf32>
    %48 = arith.mulf %45, %45 : vector<1x12x12xf32>
    %49 = arith.addf %41, %48 : vector<1x12x12xf32>
    %50 = vector.extract_strided_slice %0 {offsets = [0, 0, 0], sizes = [1, 12, 12], strides = [1, 1, 1]} : vector<1x16x16xf32> to vector<1x12x12xf32>
    %51 = arith.subf %2, %50 : vector<1x12x12xf32>
    %52 = vector.extract_strided_slice %1 {offsets = [0, 0, 0], sizes = [1, 12, 12], strides = [1, 1, 1]} : vector<1x16x16xf32> to vector<1x12x12xf32>
    %53 = arith.subf %3, %52 : vector<1x12x12xf32>
    %54 = arith.mulf %51, %51 : vector<1x12x12xf32>
    %55 = arith.addf %47, %54 : vector<1x12x12xf32>
    %56 = arith.mulf %53, %53 : vector<1x12x12xf32>
    %57 = arith.addf %49, %56 : vector<1x12x12xf32>
    %58 = vector.extract_strided_slice %0 {offsets = [0, 0, 0], sizes = [1, 12, 12], strides = [1, 1, 1]} : vector<1x16x16xf32> to vector<1x12x12xf32>
    %59 = arith.subf %2, %58 : vector<1x12x12xf32>
    %60 = vector.extract_strided_slice %1 {offsets = [0, 0, 0], sizes = [1, 12, 12], strides = [1, 1, 1]} : vector<1x16x16xf32> to vector<1x12x12xf32>
    %61 = arith.subf %3, %60 : vector<1x12x12xf32>
    %62 = arith.mulf %59, %59 : vector<1x12x12xf32>
    %63 = arith.addf %55, %62 : vector<1x12x12xf32>
    %64 = arith.mulf %61, %61 : vector<1x12x12xf32>
    %65 = arith.addf %57, %64 : vector<1x12x12xf32>
    %cst = arith.constant 0.000000e+00 : f32
    %66 = vector.broadcast %cst : f32 to vector<1x12x12xf32>
    %67 = arith.cmpf oeq, %63, %66 : vector<1x12x12xf32>
    %68 = math.rsqrt %63 : vector<1x12x12xf32>
    %cst_5 = arith.constant 1.000000e+00 : f32
    %69 = vector.broadcast %cst_5 : f32 to vector<1x12x12xf32>
    %70 = arith.select %67, %69, %68 : vector<1x12x12xi1>, vector<1x12x12xf32>
    %cst_6 = arith.constant 0.000000e+00 : f32
    %71 = vector.broadcast %cst_6 : f32 to vector<1x12x12xf32>
    %72 = arith.cmpf oeq, %65, %71 : vector<1x12x12xf32>
    %73 = math.rsqrt %65 : vector<1x12x12xf32>
    %cst_7 = arith.constant 1.000000e+00 : f32
    %74 = vector.broadcast %cst_7 : f32 to vector<1x12x12xf32>
    %75 = arith.select %72, %74, %73 : vector<1x12x12xi1>, vector<1x12x12xf32>
    %76 = vector.extract_strided_slice %0 {offsets = [0, 0, 0], sizes = [1, 12, 12], strides = [1, 1, 1]} : vector<1x16x16xf32> to vector<1x12x12xf32>
    %77 = arith.subf %2, %76 : vector<1x12x12xf32>
    %78 = vector.extract_strided_slice %1 {offsets = [0, 0, 0], sizes = [1, 12, 12], strides = [1, 1, 1]} : vector<1x16x16xf32> to vector<1x12x12xf32>
    %79 = arith.subf %3, %78 : vector<1x12x12xf32>
    %80 = arith.mulf %77, %70 : vector<1x12x12xf32>
    %81 = arith.mulf %79, %75 : vector<1x12x12xf32>
    %82 = arith.subf %80, %81 : vector<1x12x12xf32>
    %83 = math.absf %82 : vector<1x12x12xf32>
    %84 = vector.extract_strided_slice %0 {offsets = [0, 0, 1], sizes = [1, 12, 12], strides = [1, 1, 1]} : vector<1x16x16xf32> to vector<1x12x12xf32>
    %85 = arith.subf %2, %84 : vector<1x12x12xf32>
    %86 = vector.extract_strided_slice %1 {offsets = [0, 0, 1], sizes = [1, 12, 12], strides = [1, 1, 1]} : vector<1x16x16xf32> to vector<1x12x12xf32>
    %87 = arith.subf %3, %86 : vector<1x12x12xf32>
    %88 = arith.mulf %85, %70 : vector<1x12x12xf32>
    %89 = arith.mulf %87, %75 : vector<1x12x12xf32>
    %90 = arith.subf %88, %89 : vector<1x12x12xf32>
    %91 = math.absf %90 : vector<1x12x12xf32>
    %92 = arith.addf %83, %91 : vector<1x12x12xf32>
    %93 = vector.extract_strided_slice %0 {offsets = [0, 3, 3], sizes = [1, 12, 12], strides = [1, 1, 1]} : vector<1x16x16xf32> to vector<1x12x12xf32>
    %94 = arith.subf %2, %93 : vector<1x12x12xf32>
    %95 = vector.extract_strided_slice %1 {offsets = [0, 3, 3], sizes = [1, 12, 12], strides = [1, 1, 1]} : vector<1x16x16xf32> to vector<1x12x12xf32>
    %96 = arith.subf %3, %95 : vector<1x12x12xf32>
    %97 = arith.mulf %94, %70 : vector<1x12x12xf32>
    %98 = arith.mulf %96, %75 : vector<1x12x12xf32>
    %99 = arith.subf %97, %98 : vector<1x12x12xf32>
    %100 = math.absf %99 : vector<1x12x12xf32>
    %101 = arith.addf %92, %100 : vector<1x12x12xf32>
    %102 = vector.extract_strided_slice %0 {offsets = [0, 3, 1], sizes = [1, 12, 12], strides = [1, 1, 1]} : vector<1x16x16xf32> to vector<1x12x12xf32>
    %103 = arith.subf %2, %102 : vector<1x12x12xf32>
    %104 = vector.extract_strided_slice %1 {offsets = [0, 3, 1], sizes = [1, 12, 12], strides = [1, 1, 1]} : vector<1x16x16xf32> to vector<1x12x12xf32>
    %105 = arith.subf %3, %104 : vector<1x12x12xf32>
    %106 = arith.mulf %103, %70 : vector<1x12x12xf32>
    %107 = arith.mulf %105, %75 : vector<1x12x12xf32>
    %108 = arith.subf %106, %107 : vector<1x12x12xf32>
    %109 = math.absf %108 : vector<1x12x12xf32>
    %110 = arith.addf %101, %109 : vector<1x12x12xf32>
    %111 = vector.extract_strided_slice %0 {offsets = [0, 0, 1], sizes = [1, 12, 12], strides = [1, 1, 1]} : vector<1x16x16xf32> to vector<1x12x12xf32>
    %112 = arith.subf %2, %111 : vector<1x12x12xf32>
    %113 = vector.extract_strided_slice %1 {offsets = [0, 0, 1], sizes = [1, 12, 12], strides = [1, 1, 1]} : vector<1x16x16xf32> to vector<1x12x12xf32>
    %114 = arith.subf %3, %113 : vector<1x12x12xf32>
    %115 = arith.mulf %112, %70 : vector<1x12x12xf32>
    %116 = arith.mulf %114, %75 : vector<1x12x12xf32>
    %117 = arith.subf %115, %116 : vector<1x12x12xf32>
    %118 = math.absf %117 : vector<1x12x12xf32>
    %119 = arith.addf %110, %118 : vector<1x12x12xf32>
    %120 = vector.extract_strided_slice %0 {offsets = [0, 4, 4], sizes = [1, 12, 12], strides = [1, 1, 1]} : vector<1x16x16xf32> to vector<1x12x12xf32>
    %121 = arith.subf %2, %120 : vector<1x12x12xf32>
    %122 = vector.extract_strided_slice %1 {offsets = [0, 4, 4], sizes = [1, 12, 12], strides = [1, 1, 1]} : vector<1x16x16xf32> to vector<1x12x12xf32>
    %123 = arith.subf %3, %122 : vector<1x12x12xf32>
    %124 = arith.mulf %121, %70 : vector<1x12x12xf32>
    %125 = arith.mulf %123, %75 : vector<1x12x12xf32>
    %126 = arith.subf %124, %125 : vector<1x12x12xf32>
    %127 = math.absf %126 : vector<1x12x12xf32>
    %128 = arith.addf %119, %127 : vector<1x12x12xf32>
    %129 = vector.extract_strided_slice %0 {offsets = [0, 0, 0], sizes = [1, 12, 12], strides = [1, 1, 1]} : vector<1x16x16xf32> to vector<1x12x12xf32>
    %130 = arith.subf %2, %129 : vector<1x12x12xf32>
    %131 = vector.extract_strided_slice %1 {offsets = [0, 0, 0], sizes = [1, 12, 12], strides = [1, 1, 1]} : vector<1x16x16xf32> to vector<1x12x12xf32>
    %132 = arith.subf %3, %131 : vector<1x12x12xf32>
    %133 = arith.mulf %130, %70 : vector<1x12x12xf32>
    %134 = arith.mulf %132, %75 : vector<1x12x12xf32>
    %135 = arith.subf %133, %134 : vector<1x12x12xf32>
    %136 = math.absf %135 : vector<1x12x12xf32>
    %137 = arith.addf %128, %136 : vector<1x12x12xf32>
    %138 = vector.extract_strided_slice %0 {offsets = [0, 0, 0], sizes = [1, 12, 12], strides = [1, 1, 1]} : vector<1x16x16xf32> to vector<1x12x12xf32>
    %139 = arith.subf %2, %138 : vector<1x12x12xf32>
    %140 = vector.extract_strided_slice %1 {offsets = [0, 0, 0], sizes = [1, 12, 12], strides = [1, 1, 1]} : vector<1x16x16xf32> to vector<1x12x12xf32>
    %141 = arith.subf %3, %140 : vector<1x12x12xf32>
    %142 = arith.mulf %139, %70 : vector<1x12x12xf32>
    %143 = arith.mulf %141, %75 : vector<1x12x12xf32>
    %144 = arith.subf %142, %143 : vector<1x12x12xf32>
    %145 = math.absf %144 : vector<1x12x12xf32>
    %146 = arith.addf %137, %145 : vector<1x12x12xf32>
    %147 = vector.shape_cast %146 : vector<1x12x12xf32> to vector<1x1x12x12xf32>
    %cst_8 = arith.constant dense<0.000000e+00> : vector<1xf32>
    %148 = vector.multi_reduction <add>, %147, %cst_8 [1, 2, 3] : vector<1x1x12x12xf32> to vector<1xf32>
    %149 = vector.shape_cast %148 : vector<1xf32> to vector<1x1x1x1xf32>
    %150 = vector.extract %149[0, 0, 0, 0] : f32 from vector<1x1x1x1xf32>
    %151 = vector.broadcast %150 : f32 to vector<1x1x1xf32>
    %c0_9 = arith.constant 0 : index
    %c0_10 = arith.constant 0 : index
    %c0_11 = arith.constant 0 : index
    %152 = vector.load %arg3[%c0_9, %c0_10, %c0_11] : memref<1x1x1xf32, #tpu.memory_space<vmem>>, vector<1x1x1xf32>
    tpu.vector_store %arg3[%c0_9, %c0_10, %c0_11], %151 {strides = array<i32>} : memref<1x1x1xf32, #tpu.memory_space<vmem>>, vector<1x1x1xf32>,
    return
  }
  func.func @transform_0(%arg0: i32) -> (i32, i32, i32) {
    %c0_i32 = arith.constant 0 : i32
    %c0_i32_0 = arith.constant 0 : i32
    %c0_i32_1 = arith.constant 0 : i32
    return %arg0, %c0_i32, %c0_i32_0 : i32, i32, i32
  }
  func.func @transform_1(%arg0: i32) -> (i32, i32, i32) {
    %c0_i32 = arith.constant 0 : i32
    %c0_i32_0 = arith.constant 0 : i32
    %c0_i32_1 = arith.constant 0 : i32
    return %arg0, %c0_i32, %c0_i32_0 : i32, i32, i32
  }
  func.func @transform_2(%arg0: i32) -> (i32, i32, i32) {
    %c0_i32 = arith.constant 0 : i32
    %c0_i32_0 = arith.constant 0 : i32
    %c0_i32_1 = arith.constant 0 : i32
    return %arg0, %c0_i32, %c0_i32_0 : i32, i32, i32
  }
}

</mosaic_0001>

<llo_original>
// kernel: tpu_custom_call.1
$region0: #{tpu_custom_call.1}
  #allocation0 [shape = 'u32[]', space=smem, size = 0x4, offset = 0x4, fixed_abs, tag = 'smem constant byte address 0x4 - core index']
  #allocation1 [shape = 'u32[144,128]{1,0:T(1,128)}', space=vmem, size = 0x12000, scoped, tag = 'internal scratch']
  %s0 = inlined_call_operand.hbm [shape: f32[2,16,16], index: 0, kind: input, shape index: {}]
  %s1 = inlined_call_operand.hbm [shape: f32[2,16,16], index: 1, kind: input, shape index: {}]
  %s2 = inlined_call_operand.vmem [shape: f32[2,1,1], index: 2, kind: output, shape index: {}]
  %s3 = sld [smem:[#allocation0]]
  $region49: #{tpu_custom_call.1} parent=0
    _
  %s5 = ssub.s32 1, %s3
  %s6 = scalar_select 0, %s5, %s3
  $region1: #{tpu_custom_call.1} parent=0
    #allocation2 [shape = 'u8[16384]{0}', space=vmem, size = 0x4000, scoped, tag = 'input window, operand 0']
    #allocation3 [shape = 's32[2]{0}', space=sflag, size = 0x8, scoped, tag = 'scoped memory for tpu_custom_call.1']
    #allocation4 [shape = 'u8[16384]{0}', space=vmem, size = 0x4000, scoped, tag = 'input window, operand 1']
    #allocation5 [shape = 's32[2]{0}', space=sflag, size = 0x8, scoped, tag = 'scoped memory for tpu_custom_call.1']
    %7 = vsyncpa [#allocation3], 0
    %s8 = scalar_lea.sflag [#allocation3], 1
    %9 = vsyncpa %s8, 0
    %10 = vsyncpa [#allocation5], 0
    %s11 = scalar_lea.sflag [#allocation5], 1
    %12 = vsyncpa %s11, 0
    loop: start=0, step=1, limit=4
    $region2: #{tpu_custom_call.1} parent=1 // loop_pre_header
      _
    $region3: #{tpu_custom_call.1} parent=1 // loop_header
      %s14 = sphi 0, %s18
      %p15 = scmp.ge.s32.totalorder %s14, 4
      %s24 = sphi 0, %s26
      %s27 = sphi 0, %s24
      %s28 = sphi 0, %s27
      %s44 = sphi 0, %s28
      %s50 = sphi 0, %s52
      %s53 = sphi 0, %s50
      %s54 = sphi 0, %s53
      %s70 = sphi 0, %s54
      %s76 = sphi 0, %s78
      %s79 = sphi 0, %s76
      %s80 = sphi 0, %s79
      %s96 = sphi 0, %s80
    $region4: #{tpu_custom_call.1} parent=1 // loop_header_branch
      %17 = sbr.rel (%p15) target = $region8
    $region5: #{tpu_custom_call.1} parent=1 // loop_body
      %s19 = ssub.s32 %s14, 1
      %s20 = ssub.s32 %s14, 2
      %s21 = sadd.s32 %s14, 1
      %s22 = ssub.s32 %s14, %s21
      %p23 = scmp.eq.s32.totalorder %s22, 0
      %s25 = sadd.s32 %s24, 1
      %s26 = scalar_select %p23, %s24, %s25
      %p29 = pneg %p23
      %p30 = scmp.eq.s32.totalorder %s14, 1
      %p31 = por %p29, %p30
      %p32 = scmp.ne.s32.totalorder %s24, %s27
      %p33 = scmp.eq.s32.totalorder %s14, 0
      %p34 = por %p32, %p33
      %p35 = scmp.ne.s32.totalorder %s24, %s27
      %p36 = scmp.eq.s32.totalorder %s19, 1
      %p37 = por %p35, %p36
      %p38 = scmp.ne.s32.totalorder %s27, %s28
      %p39 = scmp.eq.s32.totalorder %s19, 0
      %p40 = por %p38, %p39
      %p41 = scmp.ne.s32.totalorder %s27, %s28
      %p42 = scmp.eq.s32.totalorder %s20, 1
      %p43 = por %p41, %p42
      %p45 = scmp.ne.s32.totalorder %s28, %s44
      %p46 = scmp.eq.s32.totalorder %s20, 0
      %p47 = por %p45, %p46
      %s48 = ssub.s32 %s14, %s21
      %p49 = scmp.eq.s32.totalorder %s48, 0
      %s51 = sadd.s32 %s50, 1
      %s52 = scalar_select %p49, %s50, %s51
      %p55 = pneg %p49
      %p56 = scmp.eq.s32.totalorder %s14, 1
      %p57 = por %p55, %p56
      %p58 = scmp.ne.s32.totalorder %s50, %s53
      %p59 = scmp.eq.s32.totalorder %s14, 0
      %p60 = por %p58, %p59
      %p61 = scmp.ne.s32.totalorder %s50, %s53
      %p62 = scmp.eq.s32.totalorder %s19, 1
      %p63 = por %p61, %p62
      %p64 = scmp.ne.s32.totalorder %s53, %s54
      %p65 = scmp.eq.s32.totalorder %s19, 0
      %p66 = por %p64, %p65
      %p67 = scmp.ne.s32.totalorder %s53, %s54
      %p68 = scmp.eq.s32.totalorder %s20, 1
      %p69 = por %p67, %p68
      %p71 = scmp.ne.s32.totalorder %s54, %s70
      %p72 = scmp.eq.s32.totalorder %s20, 0
      %p73 = por %p71, %p72
      %s74 = ssub.s32 %s14, %s21
      %p75 = scmp.eq.s32.totalorder %s74, 0
      %s77 = sadd.s32 %s76, 1
      %s78 = scalar_select %p75, %s76, %s77
      %p81 = pneg %p75
      %p82 = scmp.eq.s32.totalorder %s14, 1
      %p83 = por %p81, %p82
      %p84 = scmp.ne.s32.totalorder %s76, %s79
      %p85 = scmp.eq.s32.totalorder %s14, 0
      %p86 = por %p84, %p85
      %p87 = scmp.ne.s32.totalorder %s76, %s79
      %p88 = scmp.eq.s32.totalorder %s19, 1
      %p89 = por %p87, %p88
      %p90 = scmp.ne.s32.totalorder %s79, %s80
      %p91 = scmp.eq.s32.totalorder %s19, 0
      %p92 = por %p90, %p91
      %p93 = scmp.ne.s32.totalorder %s79, %s80
      %p94 = scmp.eq.s32.totalorder %s20, 1
      %p95 = por %p93, %p94
      %p97 = scmp.ne.s32.totalorder %s80, %s96
      %p98 = scmp.eq.s32.totalorder %s20, 0
      %p99 = por %p97, %p98
      %p100 = scmp.le.s32.totalorder 1, %s14
      %p101 = scmp.lt.s32.totalorder %s14, 3
      %p102 = pnand %p100, %p101
      %p103 = pneg %p102
      // Predicated region
      $region9: #{tpu_custom_call.1} parent=5 // pred_check
        _
      $region10: #{tpu_custom_call.1} parent=5 // pred_check_branch
        %105 = sbr.rel (%p102) target = $region12
      $region11: #{tpu_custom_call.1} parent=5 // pred_region
        %s106 = ssub.s32 %s14, 1
      $region12: #{tpu_custom_call.1} parent=5 // pred_fallthru
        _
      %p107 = scmp.lt.s32.totalorder %s14, 2
      // Predicated region
      $region13: #{tpu_custom_call.1} parent=5 // pred_check
        %p108 = pneg %p107
      $region14: #{tpu_custom_call.1} parent=5 // pred_check_branch
        %110 = sbr.rel (%p108) target = $region16
      $region15: #{tpu_custom_call.1} parent=5 // pred_region
        // Predicated region
        $region17: #{tpu_custom_call.1} parent=15 // pred_check
          %p111 = pneg %p34
        $region18: #{tpu_custom_call.1} parent=15 // pred_check_branch
          %113 = sbr.rel (%p111) target = $region20
        $region19: #{tpu_custom_call.1} parent=15 // pred_region
          %s114 = sand.u32 %s24, 1
          %s115 = scalar_lea.sflag [#allocation3], %s114
          %s116 = sand.u32 %s24, 1
          %s117 = smul.addr %s116, 16
          %s118 = scalar_lea.vmem [#allocation2], %s117
          %s120 = ssub.s32 256, 256
          %121 = vsyncadd %s115, %s120
          %s122 = smul.addr %s14, 2
          %s123 = smul.addr %s122, 128
          %s124 = scalar_lea.hbm %s0, %s123
          %s125 = sshll.u32 %s118, 4
          %s126 = int_to_ptr.vmem [resolvable:$true] %s125
          %131 = dma.hbm_to_vmem [thread:$0]  %s124, 256, %s126, %s115, 128, 128, 8
        $region20: #{tpu_custom_call.1} parent=15 // pred_fallthru
          _
        // Predicated region
        $region21: #{tpu_custom_call.1} parent=15 // pred_check
          %p132 = pneg %p60
        $region22: #{tpu_custom_call.1} parent=15 // pred_check_branch
          %134 = sbr.rel (%p132) target = $region24
        $region23: #{tpu_custom_call.1} parent=15 // pred_region
          %s135 = sand.u32 %s50, 1
          %s136 = scalar_lea.sflag [#allocation5], %s135
          %s137 = sand.u32 %s50, 1
          %s138 = smul.addr %s137, 16
          %s139 = scalar_lea.vmem [#allocation4], %s138
          %s141 = ssub.s32 256, 256
          %142 = vsyncadd %s136, %s141
          %s143 = smul.addr %s14, 2
          %s144 = smul.addr %s143, 128
          %s145 = scalar_lea.hbm %s1, %s144
          %s146 = sshll.u32 %s139, 4
          %s147 = int_to_ptr.vmem [resolvable:$true] %s146
          %152 = dma.hbm_to_vmem [thread:$0]  %s145, 256, %s147, %s136, 128, 128, 8
        $region24: #{tpu_custom_call.1} parent=15 // pred_fallthru
          _
      $region16: #{tpu_custom_call.1} parent=5 // pred_fallthru
        _
      %p153 = scmp.le.s32.totalorder 1, %s14
      %p154 = scmp.lt.s32.totalorder %s14, 3
      %p155 = pnand %p153, %p154
      %p156 = pneg %p155
      // Predicated region
      $region25: #{tpu_custom_call.1} parent=5 // pred_check
        _
      $region26: #{tpu_custom_call.1} parent=5 // pred_check_branch
        %158 = sbr.rel (%p155) target = $region28
      $region27: #{tpu_custom_call.1} parent=5 // pred_region
        %s159 = ssub.s32 %s14, 1
        %s160 = sand.u32 %s27, 1
        %s161 = scalar_lea.sflag [#allocation3], %s160
        %s162 = sand.u32 %s27, 1
        %s163 = smul.addr %s162, 16
        %s164 = scalar_lea.vmem [#allocation2], %s163
        // Predicated region
        $region29: #{tpu_custom_call.1} parent=27 // pred_check
          %p165 = pneg %p40
        $region30: #{tpu_custom_call.1} parent=27 // pred_check_branch
          %167 = sbr.rel (%p165) target = $region32
        $region31: #{tpu_custom_call.1} parent=27 // pred_region
          %168 = dma.done %s161, 256
        $region32: #{tpu_custom_call.1} parent=27 // pred_fallthru
          _
        %s169 = sand.u32 %s53, 1
        %s170 = scalar_lea.sflag [#allocation5], %s169
        %s171 = sand.u32 %s53, 1
        %s172 = smul.addr %s171, 16
        %s173 = scalar_lea.vmem [#allocation4], %s172
        // Predicated region
        $region33: #{tpu_custom_call.1} parent=27 // pred_check
          %p174 = pneg %p66
        $region34: #{tpu_custom_call.1} parent=27 // pred_check_branch
          %176 = sbr.rel (%p174) target = $region36
        $region35: #{tpu_custom_call.1} parent=27 // pred_region
          %177 = dma.done %s170, 256
        $region36: #{tpu_custom_call.1} parent=27 // pred_fallthru
          _
        %s178 = sand.u32 %s27, 1
        %s179 = scalar_lea.sflag [#allocation3], %s178
        %s180 = sand.u32 %s27, 1
        %s181 = smul.addr %s180, 16
        %s182 = scalar_lea.vmem [#allocation2], %s181
        %p183 = pneg %p40
        %p184 = pneg %p37
        %s185 = sand.u32 %s53, 1
        %s186 = scalar_lea.sflag [#allocation5], %s185
        %s187 = sand.u32 %s53, 1
        %s188 = smul.addr %s187, 16
        %s189 = scalar_lea.vmem [#allocation4], %s188
        %p190 = pneg %p66
        %p191 = pneg %p63
        %p192 = pneg %p92
        %p193 = pneg %p89
        %p194 = scmp.lt.s32.totalorder %s19, 1
        %s195 = scalar_select %p194, %s19, 1
        %s196 = scalar_lea.vmem %s2, %s195
        %p197 = scmp.lt.s32.totalorder %s19, 1
        %s198 = scalar_select %p197, %s19, 1
        %s199 = scalar_lea.vmem %s2, %s198
        %v200 = vld [vmem:[%s164] sm:$0xff]
        %v201 = vld [vmem:[%s164 + $0x8] sm:$0xff]
        %v202 = vld [vmem:[%s173] sm:$0xff]
        %v203 = vld [vmem:[%s173 + $0x8] sm:$0xff]
        %vm206 = vcmask 1041408
        %v207 = vrot.slane %v200, 6
        %v208 = vrot.slane %v201, 6
        %v209 = vsel %vm206, %v207, %v208
        %210 = vrot.lane.b32.xlu0 %v207, 2
        %v211 = vpop.permute.xlu0 %210
        %212 = vrot.lane.b32.xlu0 %v209, 2
        %v213 = vpop.permute.xlu0 %212
        %v216 = vsub.f32 %v200, %v211
        %v217 = vsub.f32 %v201, %v213
        %v220 = vrot.slane %v202, 6
        %v221 = vrot.slane %v203, 6
        %v222 = vsel %vm206, %v220, %v221
        %223 = vrot.lane.b32.xlu0 %v220, 2
        %v224 = vpop.permute.xlu0 %223
        %225 = vrot.lane.b32.xlu0 %v222, 2
        %v226 = vpop.permute.xlu0 %225
        %v229 = vsub.f32 %v202, %v224
        %v230 = vsub.f32 %v203, %v226
        %v231 = vmul.f32 %v216, %v216
        %v232 = vmul.f32 %v217, %v217
        %v233 = vmul.f32 %v229, %v229
        %v234 = vmul.f32 %v230, %v230
        %235 = vrot.lane.b32.xlu0 %v207, 1
        %v236 = vpop.permute.xlu0 %235
        %237 = vrot.lane.b32.xlu0 %v209, 1
        %v238 = vpop.permute.xlu0 %237
        %v241 = vsub.f32 %v200, %v236
        %v242 = vsub.f32 %v201, %v238
        %243 = vrot.lane.b32.xlu0 %v220, 1
        %v244 = vpop.permute.xlu0 %243
        %245 = vrot.lane.b32.xlu0 %v222, 1
        %v246 = vpop.permute.xlu0 %245
        %v249 = vsub.f32 %v202, %v244
        %v250 = vsub.f32 %v203, %v246
        %v251 = vmul.f32 %v241, %v241
        %v252 = vmul.f32 %v242, %v242
        %v253 = vadd.f32 %v231, %v251
        %v254 = vadd.f32 %v232, %v252
        %v255 = vmul.f32 %v249, %v249
        %v256 = vmul.f32 %v250, %v250
        %v257 = vadd.f32 %v233, %v255
        %v258 = vadd.f32 %v234, %v256
        %vm259 = vcmask 1046528
        %v260 = vrot.slane %v200, 1
        %v261 = vrot.slane %v201, 1
        %v262 = vsel %vm259, %v260, %v261
        %263 = vrot.lane.b32.xlu0 %v262, 127
        %v264 = vpop.permute.xlu0 %263
        %265 = vrot.lane.b32.xlu0 %v261, 127
        %v266 = vpop.permute.xlu0 %265
        %v269 = vsub.f32 %v200, %v264
        %v270 = vsub.f32 %v201, %v266
        %v271 = vrot.slane %v202, 1
        %v272 = vrot.slane %v203, 1
        %v273 = vsel %vm259, %v271, %v272
        %274 = vrot.lane.b32.xlu0 %v273, 127
        %v275 = vpop.permute.xlu0 %274
        %276 = vrot.lane.b32.xlu0 %v272, 127
        %v277 = vpop.permute.xlu0 %276
        %v280 = vsub.f32 %v202, %v275
        %v281 = vsub.f32 %v203, %v277
        %v282 = vmul.f32 %v269, %v269
        %v283 = vmul.f32 %v270, %v270
        %v284 = vadd.f32 %v253, %v282
        %v285 = vadd.f32 %v254, %v283
        %v286 = vmul.f32 %v280, %v280
        %v287 = vmul.f32 %v281, %v281
        %v288 = vadd.f32 %v257, %v286
        %v289 = vadd.f32 %v258, %v287
        %290 = vrot.lane.b32.xlu0 %v262, 1
        %v291 = vpop.permute.xlu0 %290
        %292 = vrot.lane.b32.xlu0 %v261, 1
        %v293 = vpop.permute.xlu0 %292
        %v296 = vsub.f32 %v200, %v291
        %v297 = vsub.f32 %v201, %v293
        %298 = vrot.lane.b32.xlu0 %v273, 1
        %v299 = vpop.permute.xlu0 %298
        %300 = vrot.lane.b32.xlu0 %v272, 1
        %v301 = vpop.permute.xlu0 %300
        %v304 = vsub.f32 %v202, %v299
        %v305 = vsub.f32 %v203, %v301
        %v306 = vmul.f32 %v296, %v296
        %v307 = vmul.f32 %v297, %v297
        %v308 = vadd.f32 %v284, %v306
        %v309 = vadd.f32 %v285, %v307
        %v310 = vmul.f32 %v304, %v304
        %v311 = vmul.f32 %v305, %v305
        %v312 = vadd.f32 %v288, %v310
        %v313 = vadd.f32 %v289, %v311
        %v314 = vadd.f32 %v308, %v251
        %v315 = vadd.f32 %v309, %v252
        %v316 = vadd.f32 %v312, %v255
        %v317 = vadd.f32 %v313, %v256
        %vm318 = vcmask 1045504
        %v319 = vrot.slane %v200, 2
        %v320 = vrot.slane %v201, 2
        %v321 = vsel %vm318, %v319, %v320
        %322 = vrot.lane.b32.xlu0 %v321, 126
        %v323 = vpop.permute.xlu0 %322
        %324 = vrot.lane.b32.xlu0 %v320, 126
        %v325 = vpop.permute.xlu0 %324
        %v328 = vsub.f32 %v200, %v323
        %v329 = vsub.f32 %v201, %v325
        %v330 = vrot.slane %v202, 2
        %v331 = vrot.slane %v203, 2
        %v332 = vsel %vm318, %v330, %v331
        %333 = vrot.lane.b32.xlu0 %v332, 126
        %v334 = vpop.permute.xlu0 %333
        %335 = vrot.lane.b32.xlu0 %v331, 126
        %v336 = vpop.permute.xlu0 %335
        %v339 = vsub.f32 %v202, %v334
        %v340 = vsub.f32 %v203, %v336
        %v341 = vmul.f32 %v328, %v328
        %v342 = vmul.f32 %v329, %v329
        %v343 = vadd.f32 %v314, %v341
        %v344 = vadd.f32 %v315, %v342
        %v345 = vmul.f32 %v339, %v339
        %v346 = vmul.f32 %v340, %v340
        %v347 = vadd.f32 %v316, %v345
        %v348 = vadd.f32 %v317, %v346
        %v349 = vadd.f32 %v343, %v231
        %v350 = vadd.f32 %v344, %v232
        %v351 = vadd.f32 %v347, %v233
        %v352 = vadd.f32 %v348, %v234
        %v353 = vadd.f32 %v349, %v231
        %v354 = vadd.f32 %v350, %v232
        %v355 = vadd.f32 %v351, %v233
        %v356 = vadd.f32 %v352, %v234
        %vm357 = vcmp.eq.f32.partialorder %v353, 0.0
        %vm358 = vcmp.eq.f32.partialorder %v354, 0.0
        %v359 = vrsqrt.pop %v353
        %v360 = vrsqrt.pop %v354
        %v361 = vsel %vm357, 1.0, %v359
        %v362 = vsel %vm358, 1.0, %v360
        %vm363 = vcmp.eq.f32.partialorder %v355, 0.0
        %vm364 = vcmp.eq.f32.partialorder %v356, 0.0
        %v365 = vrsqrt.pop %v355
        %v366 = vrsqrt.pop %v356
        %v367 = vsel %vm363, 1.0, %v365
        %v368 = vsel %vm364, 1.0, %v366
        %v369 = vmul.f32 %v216, %v361
        %v370 = vmul.f32 %v217, %v362
        %v371 = vmul.f32 %v229, %v367
        %v372 = vmul.f32 %v230, %v368
        %v373 = vsub.f32 %v369, %v371
        %v374 = vsub.f32 %v370, %v372
        %v375 = vand.u32 2147483647, %v373
        %v376 = vand.u32 2147483647, %v374
        %v377 = vmul.f32 %v241, %v361
        %v378 = vmul.f32 %v242, %v362
        %v379 = vmul.f32 %v249, %v367
        %v380 = vmul.f32 %v250, %v368
        %v381 = vsub.f32 %v377, %v379
        %v382 = vsub.f32 %v378, %v380
        %v383 = vand.u32 2147483647, %v381
        %v384 = vand.u32 2147483647, %v382
        %v385 = vadd.f32 %v375, %v383
        %v386 = vadd.f32 %v376, %v384
        %v387 = vmul.f32 %v269, %v361
        %v388 = vmul.f32 %v270, %v362
        %v389 = vmul.f32 %v280, %v367
        %v390 = vmul.f32 %v281, %v368
        %v391 = vsub.f32 %v387, %v389
        %v392 = vsub.f32 %v388, %v390
        %v393 = vand.u32 2147483647, %v391
        %v394 = vand.u32 2147483647, %v392
        %v395 = vadd.f32 %v385, %v393
        %v396 = vadd.f32 %v386, %v394
        %v397 = vmul.f32 %v296, %v361
        %v398 = vmul.f32 %v297, %v362
        %v399 = vmul.f32 %v304, %v367
        %v400 = vmul.f32 %v305, %v368
        %v401 = vsub.f32 %v397, %v399
        %v402 = vsub.f32 %v398, %v400
        %v403 = vand.u32 2147483647, %v401
        %v404 = vand.u32 2147483647, %v402
        %v405 = vadd.f32 %v395, %v403
        %v406 = vadd.f32 %v396, %v404
        %v407 = vadd.f32 %v405, %v383
        %v408 = vadd.f32 %v406, %v384
        %v409 = vmul.f32 %v328, %v361
        %v410 = vmul.f32 %v329, %v362
        %v411 = vmul.f32 %v339, %v367
        %v412 = vmul.f32 %v340, %v368
        %v413 = vsub.f32 %v409, %v411
        %v414 = vsub.f32 %v410, %v412
        %v415 = vand.u32 2147483647, %v413
        %v416 = vand.u32 2147483647, %v414
        %v417 = vadd.f32 %v407, %v415
        %v418 = vadd.f32 %v408, %v416
        %v419 = vadd.f32 %v417, %v375
        %v420 = vadd.f32 %v418, %v376
        %v421 = vadd.f32 %v419, %v375
        %v422 = vadd.f32 %v420, %v376
        %v425 = vrot.slane %v421, 2
        %v426 = vrot.slane %v422, 2
        %v427 = vsel %vm318, %v425, %v426
        %428 = vrot.lane.b32.xlu0 %v427, 126
        %v429 = vpop.permute.xlu0 %428
        %430 = vrot.lane.b32.xlu0 %v426, 126
        %v431 = vpop.permute.xlu0 %430
        %vm434 = vcmask 97280
        %v435 = vsel %vm434, %v429, 0.0
        %vm436 = vcmask 93184
        %v437 = vsel %vm436, %v431, 0.0
        %v438 = vadd.f32 %v435, %v437
        %439 = vadd.xlane.f32.xlu0 %v438
        %v440 = vpop.xlane.xlu0 %439
        %v441 = vrot.slane %v440, 4
        %v442 = vadd.f32 %v440, %v441
        %v443 = vrot.slane %v442, 2
        %v444 = vadd.f32 %v442, %v443
        %v445 = vrot.slane %v444, 1
        %v446 = vadd.f32 %v444, %v445
        %s447 = vtos %v446
        %v448 = vstv %s447
        %vm449 = vcmask 0
        %450 = vst.msk [vmem:[%s199] sm:$0x1] %vm449, %v448
        %p451 = scmp.lt.s32.totalorder %s19, 1
        %s452 = scalar_select %p451, %s19, 1
        %s453 = scalar_lea.vmem %s2, %s452
        // Predicated region
        $region37: #{tpu_custom_call.1} parent=27 // pred_check
          %p454 = pneg %p89
        $region38: #{tpu_custom_call.1} parent=27 // pred_check_branch
          %456 = sbr.rel (%p454) target = $region40
        $region39: #{tpu_custom_call.1} parent=27 // pred_region
          _
        $region40: #{tpu_custom_call.1} parent=27 // pred_fallthru
          _
      $region28: #{tpu_custom_call.1} parent=5 // pred_fallthru
        _
      %p457 = scmp.le.s32.totalorder 2, %s14
      // Predicated region
      $region41: #{tpu_custom_call.1} parent=5 // pred_check
        %p458 = pneg %p457
      $region42: #{tpu_custom_call.1} parent=5 // pred_check_branch
        %460 = sbr.rel (%p458) target = $region44
      $region43: #{tpu_custom_call.1} parent=5 // pred_region
        %s461 = ssub.s32 %s14, 2
        // Predicated region
        $region45: #{tpu_custom_call.1} parent=43 // pred_check
          %p462 = pneg %p95
        $region46: #{tpu_custom_call.1} parent=43 // pred_check_branch
          %464 = sbr.rel (%p462) target = $region48
        $region47: #{tpu_custom_call.1} parent=43 // pred_region
          %p465 = scmp.lt.s32.totalorder %s20, 1
          %s466 = scalar_select %p465, %s20, 1
          %s467 = scalar_lea.vmem %s2, %s466
        $region48: #{tpu_custom_call.1} parent=43 // pred_fallthru
          _
      $region44: #{tpu_custom_call.1} parent=5 // pred_fallthru
        _
    $region6: #{tpu_custom_call.1} parent=1 // loop_footer
      %s18 = sadd.s32 1, %s14
    $region7: #{tpu_custom_call.1} parent=1 // loop_footer_branch
      %13 = sbr.rel target = $region3
    $region8: #{tpu_custom_call.1} parent=1 // loop_exit
      _
    %468 = vsyncpa [#allocation3], 1
    %s469 = scalar_lea.sflag [#allocation3], 1
    %470 = vsyncpa %s469, 1
    %471 = vsyncpa [#allocation5], 1
    %s472 = scalar_lea.sflag [#allocation5], 1
    %473 = vsyncpa %s472, 1

</llo_original>
